<compile_context>
chip_gen: v7x
topology: tpu7x:2x2x1
jax: 0.10.0
libtpu: 0.0.40
codegen_flags: <defaults>
</compile_context>

<pallas_src>
import functools

import jax
import jax.numpy as jnp
from jax.experimental import pallas as pl
from jax.experimental.pallas import tpu as pltpu


def _round_up(v, m):
    return (v + m - 1) // m * m


# ----------------------------------------------------------------------------
# Architecture construction (mirrors json2pheno.__init__ exactly, sans torch)
# ----------------------------------------------------------------------------
def build_scheme(json_cfg, nin, nout):
    """Reproduce the fw_scheme / layer-shape logic of json2pheno.__init__."""
    n_in = nin
    fw_map = {}
    active_list = []
    for param in json_cfg.keys():
        if param[:-2] == "active" and json_cfg[param] == 1:
            active_list.append(param[-1])

    layer_shapes = {}  # key -> (in_features, out_features)
    for new_i, old_i in enumerate(active_list):
        key = str(new_i)
        layer_shapes[key] = (n_in, json_cfg["n_nodes"])
        if new_i == len(active_list) - 1:
            fw_map[key] = ["out"]
            n_in = json_cfg["n_nodes"]
            break
        fw_map[key] = [str(new_i + 1)]
        target = json_cfg["skip_" + str(old_i)] + new_i + 1
        if target >= len(active_list):
            fw_map[key].append("out")
        elif target > new_i + 1:
            fw_map[key].append(str(target))
        n_in = json_cfg["n_nodes"]

    layer_shapes["out"] = (n_in, nout)
    num_layers = len(active_list)
    return fw_map, layer_shapes, num_layers


def init_params(layer_shapes, key):
    """Deterministic torch-Linear-style init: U(-1/sqrt(fan_in), 1/sqrt(fan_in))."""
    params = {}
    for name, (fin, fout) in layer_shapes.items():
        key, kw, kb = jax.random.split(key, 3)
        bound = 1.0 / jnp.sqrt(jnp.float32(fin))
        w = jax.random.uniform(kw, (fin, fout), jnp.float32, -bound, bound)  # [fin, fout]
        b = jax.random.uniform(kb, (1, fout), jnp.float32, -bound, bound)
        params[name] = (w, b)
    return params


def prepare_params(params, layer_shapes, num_layers):
    """ONE-TIME padding/stacking of params into the kernel's device layout.

    Returns:
      w_stack: [L+1, F_PAD, F_PAD] bf16 (torch Linear weight^T, zero-padded)
      b_stack: [L+1, 1, F_PAD] f32
      f_pad:   lane-padded feature width (multiple of 128)
    """
    dims = [d for shp in layer_shapes.values() for d in shp]
    f_pad = _round_up(max(dims), 128)
    names = [str(k) for k in range(num_layers)] + ["out"]
    ws, bs = [], []
    for name in names:
        w, b = params[name]
        fin, fout = w.shape
        wp = jnp.pad(w, ((0, f_pad - fin), (0, f_pad - fout)))
        bp = jnp.pad(b, ((0, 0), (0, f_pad - fout)))
        ws.append(wp.astype(jnp.bfloat16))   # bf16 MXU operands (f32 accumulate)
        bs.append(bp)                        # bias stays f32 (added post-MXU)
    return jnp.stack(ws), jnp.stack(bs), f_pad


# ----------------------------------------------------------------------------
# Fully fused Pallas kernel: whole network per batch tile, unrolled in Python.
# ----------------------------------------------------------------------------
def fused_net_kernel(x_ref, w_ref, b_ref, o_ref, *, fw_scheme, num_layers):
    # Entire network for one batch tile; node loop unrolled in Python, all
    # intermediates stay in vregs/VMEM.  Padded W/b columns are zero and
    # tanh(0) == 0, so pad lanes stay exactly 0 through every skip-sum.
    X = {"0": x_ref[...]}                                  # f32 [TB, F]
    for k in range(num_layers):
        key = str(k)
        acc = jnp.dot(X[key].astype(jnp.bfloat16), w_ref[k],
                      preferred_element_type=jnp.float32)  # bf16 MXU, f32 acc
        y = jnp.tanh(acc + b_ref[k])                       # f32 VPU/EUP (v5e-safe)
        # Accumulate the node output once per outgoing skip edge.
        for target in fw_scheme[key]:
            X[target] = (X[target] + y) if target in X else y

    x_out = X["out"] if num_layers else X["0"]
    y = jnp.dot(x_out.astype(jnp.bfloat16), w_ref[num_layers],
                preferred_element_type=jnp.float32) + b_ref[num_layers]
    o_ref[...] = y.astype(o_ref.dtype)


def _choose_batch_tile(batch, f_pad, weight_vmem_bytes):
    """Batch tile: multiple of 8 sublanes; >=2 tiles when B allows (v7x 2-TC
    sharding of the 'parallel' axis); capped so double-buffered x/out tiles
    plus resident weights stay inside a conservative VMEM budget."""
    TB_CAP = 2048
    b8 = _round_up(batch, 8)
    tb = _round_up((b8 + 1) // 2, 8) if b8 >= 16 else b8
    tb = min(tb, TB_CAP)
    budget = 48 * 1024 * 1024  # conservative vs. v7x's 64 MiB physical VMEM
    while tb > 8 and weight_vmem_bytes + 4 * tb * f_pad * 4 > budget:
        tb = max(8, _round_up(tb // 2, 8))
    return tb


@functools.partial(jax.jit, static_argnums=(3, 4, 5))
def json2pheno_forward(x, w_stack, b_stack, fw_scheme_t, num_layers, nout):
    """Run the whole network in one pallas_call. Returns [B, nout] f32."""
    fw_scheme = {k: list(v) for k, v in fw_scheme_t}
    B, nin = x.shape
    f_pad = w_stack.shape[-1]

    # Resident-weight VMEM footprint (assume double-buffered blocks).
    weight_vmem = 2 * (w_stack.size * w_stack.dtype.itemsize
                       + b_stack.size * b_stack.dtype.itemsize)
    if weight_vmem > 40 * 1024 * 1024:
        # TODO(synk): add a K-tiled grid axis over f_pad (stream weight slices)
        # once the resident weight set no longer fits v7x's 64 MiB VMEM.
        raise NotImplementedError("weight set too large for all-resident VMEM design")

    tb = _choose_batch_tile(B, f_pad, weight_vmem)
    b_padded = _round_up(B, tb)
    n_tiles = b_padded // tb

    # Single pad op (no zeros + scatter); pad lanes/rows are exactly zero.
    x_pad = jnp.pad(x, ((0, b_padded - B), (0, f_pad - nin)))

    kernel = functools.partial(fused_net_kernel, fw_scheme=fw_scheme,
                               num_layers=num_layers)

    n_mm = num_layers + 1
    cost = pl.CostEstimate(
        flops=2 * b_padded * f_pad * f_pad * n_mm,
        transcendentals=b_padded * f_pad * num_layers,
        bytes_accessed=(2 * b_padded * f_pad * 4                      # x in + out
                        + w_stack.size * w_stack.dtype.itemsize       # weights once
                        + b_stack.size * b_stack.dtype.itemsize),
    )

    vmem_limit = min(128 * 1024 * 1024,
                     max(32 * 1024 * 1024,
                         int(1.5 * (weight_vmem + 4 * tb * f_pad * 4)) + (4 << 20)))

    out_pad = pl.pallas_call(
        kernel,
        out_shape=jax.ShapeDtypeStruct((b_padded, f_pad), jnp.float32),
        grid=(n_tiles,),
        in_specs=[
            pl.BlockSpec((tb, f_pad), lambda i: (i, 0)),       # activations (tiled)
            pl.BlockSpec(w_stack.shape, lambda i: (0, 0, 0)),  # all weights, resident
            pl.BlockSpec(b_stack.shape, lambda i: (0, 0, 0)),  # all biases, resident
        ],
        out_specs=pl.BlockSpec((tb, f_pad), lambda i: (i, 0)),
        compiler_params=pltpu.CompilerParams(
            dimension_semantics=("parallel",),
            vmem_limit_bytes=vmem_limit,
        ),
        cost_estimate=cost,
    )(x_pad, w_stack, b_stack)

    return out_pad[:B, :nout]


# Pure-JAX f32 reference (for correctness check of the Pallas path).
def json2pheno_ref(x, params, fw_scheme, num_layers):
    X = {"0": [x]}
    for k in range(num_layers):
        key = str(k)
        w, b = params[key]
        temp_x = functools.reduce(lambda a, c: a + c, X[key])
        temp_out = jnp.tanh(temp_x @ w + b)
        for target in fw_scheme[key]:
            X.setdefault(target, []).append(temp_out)
    temp_x = functools.reduce(lambda a, c: a + c, X["out"]) if num_layers else x
    w, b = params["out"]
    return temp_x @ w + b


# ----------------------------------------------------------------------------
if __name__ == "__main__":
    # Synthetic json config (3 active nodes, skip connections routing to 'out').
    json_cfg = {
        "n_nodes": 32,
        "active_0": 1,
        "active_1": 1,
        "active_2": 1,
        "active_3": 0,
        "skip_0": 2,
        "skip_1": 1,
        "skip_2": 1,
        "skip_3": 1,
    }
    nin, nout, batch = 16, 8, 8

    fw_scheme, layer_shapes, num_layers = build_scheme(json_cfg, nin, nout)
    # Expected: {'0': ['1', 'out'], '1': ['2', 'out'], '2': ['out']}

    key = jax.random.PRNGKey(0)
    key, kx = jax.random.split(key)
    params = init_params(layer_shapes, key)
    x = jax.random.normal(kx, (batch, nin), jnp.float32)

    # One-time (per-model) padding/stacking — hoisted out of the forward path.
    w_stack, b_stack, f_pad = prepare_params(params, layer_shapes, num_layers)
    w_stack = jax.block_until_ready(w_stack)
    b_stack = jax.block_until_ready(b_stack)

    # Hashable routing table for the jitted forward (static arg).
    fw_scheme_t = tuple(sorted((k, tuple(v)) for k, v in fw_scheme.items()))

    out = json2pheno_forward(x, w_stack, b_stack, fw_scheme_t, num_layers, nout)
    out = jax.block_until_ready(out)

    ref = json2pheno_ref(x, params, fw_scheme, num_layers)
    assert out.shape == (batch, nout), out.shape
    # bf16 MXU operands (f32 accumulation) -> looser tolerance than pure-f32 ref.
    assert jnp.allclose(out, ref, atol=5e-2, rtol=5e-2), "mismatch vs reference"

    print("KERNEL_OK")
</pallas_src>

<mosaic_0001>
module attributes {stable_mosaic.version = 11 : i64} {
  func.func @fused_net_kernel(%arg0: i32, %arg1: memref<8x128xf32, #tpu.memory_space<vmem>>, %arg2: memref<4x128x128xbf16, #tpu.memory_space<vmem>>, %arg3: memref<4x1x128xf32, #tpu.memory_space<vmem>>, %arg4: memref<8x128xf32, #tpu.memory_space<vmem>>) attributes {dimension_semantics = [#tpu.dimension_semantics<parallel>], iteration_bounds = array<i64: 1>, scalar_prefetch = 0 : i64, scratch_operands = 0 : i64, tpu.core_type = #tpu.core_type<tc>, window_params = [{transform_indices = @transform_0, window_bounds = array<i64: 8, 128>}, {pipeline_mode = #tpu.pipeline_mode<synchronous>, transform_indices = @transform_1, window_bounds = array<i64: 4, 128, 128>}, {pipeline_mode = #tpu.pipeline_mode<synchronous>, transform_indices = @transform_2, window_bounds = array<i64: 4, 1, 128>}, {transform_indices = @transform_3, window_bounds = array<i64: 8, 128>}]} {
    %c0 = arith.constant 0 : index
    %c0_0 = arith.constant 0 : index
    %0 = vector.load %arg1[%c0, %c0_0] : memref<8x128xf32, #tpu.memory_space<vmem>>, vector<8x128xf32>
    %1 = arith.truncf %0 : vector<8x128xf32> to vector<8x128xbf16>
    %c0_1 = arith.constant 0 : index
    %c0_2 = arith.constant 0 : index
    %c0_3 = arith.constant 0 : index
    %2 = vector.load %arg2[%c0_1, %c0_2, %c0_3] : memref<4x128x128xbf16, #tpu.memory_space<vmem>>, vector<1x128x128xbf16>
    %3 = vector.shape_cast %2 : vector<1x128x128xbf16> to vector<128x128xbf16>
    %cst = arith.constant dense<0.000000e+00> : vector<8x128xf32>
    %4 = tpu.matmul %1, %3, %cst {dimension_numbers = #tpu.dot_dimension_numbers<[1], [0], [0], [1], [0, 0, 1, 1], [], []>} : vector<8x128xbf16>, vector<128x128xbf16>, vector<8x128xf32> -> vector<8x128xf32>
    %c0_4 = arith.constant 0 : index
    %c0_5 = arith.constant 0 : index
    %c0_6 = arith.constant 0 : index
    %5 = vector.load %arg3[%c0_4, %c0_5, %c0_6] : memref<4x1x128xf32, #tpu.memory_space<vmem>>, vector<1x1x128xf32>
    %6 = vector.shape_cast %5 : vector<1x1x128xf32> to vector<1x128xf32>
    %7 = vector.broadcast %6 : vector<1x128xf32> to vector<8x128xf32>
    %8 = arith.addf %4, %7 : vector<8x128xf32>
    %9 = math.tanh %8 : vector<8x128xf32>
    %10 = arith.truncf %9 : vector<8x128xf32> to vector<8x128xbf16>
    %c1 = arith.constant 1 : index
    %c0_7 = arith.constant 0 : index
    %c0_8 = arith.constant 0 : index
    %11 = vector.load %arg2[%c1, %c0_7, %c0_8] : memref<4x128x128xbf16, #tpu.memory_space<vmem>>, vector<1x128x128xbf16>
    %12 = vector.shape_cast %11 : vector<1x128x128xbf16> to vector<128x128xbf16>
    %cst_9 = arith.constant dense<0.000000e+00> : vector<8x128xf32>
    %13 = tpu.matmul %10, %12, %cst_9 {dimension_numbers = #tpu.dot_dimension_numbers<[1], [0], [0], [1], [0, 0, 1, 1], [], []>} : vector<8x128xbf16>, vector<128x128xbf16>, vector<8x128xf32> -> vector<8x128xf32>
    %c1_10 = arith.constant 1 : index
    %c0_11 = arith.constant 0 : index
    %c0_12 = arith.constant 0 : index
    %14 = vector.load %arg3[%c1_10, %c0_11, %c0_12] : memref<4x1x128xf32, #tpu.memory_space<vmem>>, vector<1x1x128xf32>
    %15 = vector.shape_cast %14 : vector<1x1x128xf32> to vector<1x128xf32>
    %16 = vector.broadcast %15 : vector<1x128xf32> to vector<8x128xf32>
    %17 = arith.addf %13, %16 : vector<8x128xf32>
    %18 = math.tanh %17 : vector<8x128xf32>
    %19 = arith.addf %9, %18 : vector<8x128xf32>
    %20 = arith.truncf %18 : vector<8x128xf32> to vector<8x128xbf16>
    %c2 = arith.constant 2 : index
    %c0_13 = arith.constant 0 : index
    %c0_14 = arith.constant 0 : index
    %21 = vector.load %arg2[%c2, %c0_13, %c0_14] : memref<4x128x128xbf16, #tpu.memory_space<vmem>>, vector<1x128x128xbf16>
    %22 = vector.shape_cast %21 : vector<1x128x128xbf16> to vector<128x128xbf16>
    %cst_15 = arith.constant dense<0.000000e+00> : vector<8x128xf32>
    %23 = tpu.matmul %20, %22, %cst_15 {dimension_numbers = #tpu.dot_dimension_numbers<[1], [0], [0], [1], [0, 0, 1, 1], [], []>} : vector<8x128xbf16>, vector<128x128xbf16>, vector<8x128xf32> -> vector<8x128xf32>
    %c2_16 = arith.constant 2 : index
    %c0_17 = arith.constant 0 : index
    %c0_18 = arith.constant 0 : index
    %24 = vector.load %arg3[%c2_16, %c0_17, %c0_18] : memref<4x1x128xf32, #tpu.memory_space<vmem>>, vector<1x1x128xf32>
    %25 = vector.shape_cast %24 : vector<1x1x128xf32> to vector<1x128xf32>
    %26 = vector.broadcast %25 : vector<1x128xf32> to vector<8x128xf32>
    %27 = arith.addf %23, %26 : vector<8x128xf32>
    %28 = math.tanh %27 : vector<8x128xf32>
    %29 = arith.addf %19, %28 : vector<8x128xf32>
    %30 = arith.truncf %29 : vector<8x128xf32> to vector<8x128xbf16>
    %c3 = arith.constant 3 : index
    %c0_19 = arith.constant 0 : index
    %c0_20 = arith.constant 0 : index
    %31 = vector.load %arg2[%c3, %c0_19, %c0_20] : memref<4x128x128xbf16, #tpu.memory_space<vmem>>, vector<1x128x128xbf16>
    %32 = vector.shape_cast %31 : vector<1x128x128xbf16> to vector<128x128xbf16>
    %cst_21 = arith.constant dense<0.000000e+00> : vector<8x128xf32>
    %33 = tpu.matmul %30, %32, %cst_21 {dimension_numbers = #tpu.dot_dimension_numbers<[1], [0], [0], [1], [0, 0, 1, 1], [], []>} : vector<8x128xbf16>, vector<128x128xbf16>, vector<8x128xf32> -> vector<8x128xf32>
    %c3_22 = arith.constant 3 : index
    %c0_23 = arith.constant 0 : index
    %c0_24 = arith.constant 0 : index
    %34 = vector.load %arg3[%c3_22, %c0_23, %c0_24] : memref<4x1x128xf32, #tpu.memory_space<vmem>>, vector<1x1x128xf32>
    %35 = vector.shape_cast %34 : vector<1x1x128xf32> to vector<1x128xf32>
    %36 = vector.broadcast %35 : vector<1x128xf32> to vector<8x128xf32>
    %37 = arith.addf %33, %36 : vector<8x128xf32>
    %c0_25 = arith.constant 0 : index
    %c0_26 = arith.constant 0 : index
    %38 = vector.load %arg4[%c0_25, %c0_26] : memref<8x128xf32, #tpu.memory_space<vmem>>, vector<8x128xf32>
    tpu.vector_store %arg4[%c0_25, %c0_26], %37 {strides = array<i32>} : memref<8x128xf32, #tpu.memory_space<vmem>>, vector<8x128xf32>,
    return
  }
  func.func @transform_0(%arg0: i32) -> (i32, i32) {
    %c0_i32 = arith.constant 0 : i32
    %c0_i32_0 = arith.constant 0 : i32
    return %arg0, %c0_i32 : i32, i32
  }
  func.func @transform_1(%arg0: i32) -> (i32, i32, i32) {
    %c0_i32 = arith.constant 0 : i32
    %c0_i32_0 = arith.constant 0 : i32
    %c0_i32_1 = arith.constant 0 : i32
    %c0_i32_2 = arith.constant 0 : i32
    return %c0_i32, %c0_i32_0, %c0_i32_1 : i32, i32, i32
  }
  func.func @transform_2(%arg0: i32) -> (i32, i32, i32) {
    %c0_i32 = arith.constant 0 : i32
    %c0_i32_0 = arith.constant 0 : i32
    %c0_i32_1 = arith.constant 0 : i32
    %c0_i32_2 = arith.constant 0 : i32
    return %c0_i32, %c0_i32_0, %c0_i32_1 : i32, i32, i32
  }
  func.func @transform_3(%arg0: i32) -> (i32, i32) {
    %c0_i32 = arith.constant 0 : i32
    %c0_i32_0 = arith.constant 0 : i32
    return %arg0, %c0_i32 : i32, i32
  }
}

</mosaic_0001>

<llo_original>
// kernel: json2pheno_forward.1
$region0: #{json2pheno_forward.1}
  #allocation0 [shape = 'u32[]', space=smem, size = 0x4, offset = 0x4, fixed_abs, tag = 'smem constant byte address 0x4 - core index']
  #allocation1 [shape = 'u32[144,128]{1,0:T(1,128)}', space=vmem, size = 0x12000, scoped, tag = 'internal scratch']
  %s0 = inlined_call_operand.vmem [shape: f32[8,128], index: 0, kind: input, shape index: {}]
  %s1 = inlined_call_operand.hbm [shape: bf16[4,128,128], index: 1, kind: input, shape index: {}]
  %s2 = inlined_call_operand.vmem [shape: f32[4,1,128], index: 2, kind: input, shape index: {}]
  %s3 = inlined_call_operand.hbm [shape: f32[8,128], index: 3, kind: output, shape index: {}]
  %s4 = sld [smem:[#allocation0]]
  $region26: #{json2pheno_forward.1} parent=0
    _
  %s6 = ssub.s32 1, %s4
  %s7 = scalar_select 0, %s6, %s4
  $region1: #{json2pheno_forward.1} parent=0
    #allocation2 [shape = 'u8[131072]{0}', space=vmem, size = 0x20000, scoped, tag = 'input window, operand 1, single buffered']
    #allocation3 [shape = 's32[1]{0}', space=sflag, size = 0x4, scoped, tag = 'scoped memory for json2pheno_forward.1']
    #allocation4 [shape = 's32[1]{0}', space=sflag, size = 0x4, scoped, tag = 'scoped memory for json2pheno_forward.1']
    #allocation5 [shape = 'u8[4096]{0}', space=vmem, size = 0x1000, scoped, tag = 'output window, operand 0, single buffered']
    %8 = vsyncpa [#allocation3], 0
    %9 = vsyncpa [#allocation4], 0
    // Predicated region
    $region2: #{json2pheno_forward.1} parent=1 // pred_check
      _
    $region3: #{json2pheno_forward.1} parent=1 // pred_check_branch
      %11 = sbr.rel (0) target = $region5
    $region4: #{json2pheno_forward.1} parent=1 // pred_region
      _
    $region5: #{json2pheno_forward.1} parent=1 // pred_fallthru
      _
    // Predicated region
    $region6: #{json2pheno_forward.1} parent=1 // pred_check
      _
    $region7: #{json2pheno_forward.1} parent=1 // pred_check_branch
      %13 = sbr.rel (0) target = $region9
    $region8: #{json2pheno_forward.1} parent=1 // pred_region
      %s15 = ssub.s32 4096, 4096
      %16 = vsyncadd [#allocation3], %s15
      %s17 = sshll.u32 [#allocation2], 4
      %s18 = int_to_ptr.vmem [resolvable:$true] %s17
      %23 = dma.hbm_to_vmem [thread:$0]  %s1, 4096, %s18, [#allocation3], 64, 64, 4
    $region9: #{json2pheno_forward.1} parent=1 // pred_fallthru
      _
    // Predicated region
    $region10: #{json2pheno_forward.1} parent=1 // pred_check
      _
    $region11: #{json2pheno_forward.1} parent=1 // pred_check_branch
      %25 = sbr.rel (0) target = $region13
    $region12: #{json2pheno_forward.1} parent=1 // pred_region
      _
    $region13: #{json2pheno_forward.1} parent=1 // pred_fallthru
      _
    // Predicated region
    $region14: #{json2pheno_forward.1} parent=1 // pred_check
      _
    $region15: #{json2pheno_forward.1} parent=1 // pred_check_branch
      %27 = sbr.rel (0) target = $region17
    $region16: #{json2pheno_forward.1} parent=1 // pred_region
      %28 = dma.done [#allocation3], 4096
    $region17: #{json2pheno_forward.1} parent=1 // pred_fallthru
      _
    %v30 = vld [vmem:[%s0] sm:$0xff]
    %v31 = vpack.c.bf16 %v30, %v30
    %v32 = vld [vmem:[#allocation2] sm:$0xf]
    %v33 = vld [vmem:[#allocation2 + $0x4] sm:$0xf]
    %v34 = vld [vmem:[#allocation2 + $0x8] sm:$0xf]
    %v35 = vld [vmem:[#allocation2 + $0xc] sm:$0xf]
    %v36 = vld [vmem:[#allocation2 + $0x10] sm:$0xf]
    %v37 = vld [vmem:[#allocation2 + $0x14] sm:$0xf]
    %v38 = vld [vmem:[#allocation2 + $0x18] sm:$0xf]
    %v39 = vld [vmem:[#allocation2 + $0x1c] sm:$0xf]
    %v40 = vld [vmem:[#allocation2 + $0x20] sm:$0xf]
    %v41 = vld [vmem:[#allocation2 + $0x24] sm:$0xf]
    %v42 = vld [vmem:[#allocation2 + $0x28] sm:$0xf]
    %v43 = vld [vmem:[#allocation2 + $0x2c] sm:$0xf]
    %v44 = vld [vmem:[#allocation2 + $0x30] sm:$0xf]
    %v45 = vld [vmem:[#allocation2 + $0x34] sm:$0xf]
    %v46 = vld [vmem:[#allocation2 + $0x38] sm:$0xf]
    %v47 = vld [vmem:[#allocation2 + $0x3c] sm:$0xf]
    %v48 = vld [vmem:[%s2] sm:$0x1]
    %v50 = vlaneseq
    %v51 = vshrl.u32 %v50, 7
    %v52 = vsub.s32 0, %v51
    %v53 = vrot.slane %v48, %v52
    %v71 = vunpack.c.l.b16 %v32
    %v72 = vunpack.c.l.b16 %v33
    %v73 = vunpack.c.l.b16 %v34
    %v74 = vunpack.c.l.b16 %v35
    %v75 = vunpack.c.l.b16 %v36
    %v76 = vunpack.c.l.b16 %v37
    %v77 = vunpack.c.l.b16 %v38
    %v78 = vunpack.c.l.b16 %v39
    %v79 = vunpack.c.l.b16 %v40
    %v80 = vunpack.c.l.b16 %v41
    %v81 = vunpack.c.l.b16 %v42
    %v82 = vunpack.c.l.b16 %v43
    %v83 = vunpack.c.l.b16 %v44
    %v84 = vunpack.c.l.b16 %v45
    %v85 = vunpack.c.l.b16 %v46
    %v86 = vunpack.c.l.b16 %v47
    %v87 = vpack.c.b16 %v72, %v71
    %v88 = vpack.c.b16 %v74, %v73
    %v89 = vpack.c.b16 %v76, %v75
    %v90 = vpack.c.b16 %v78, %v77
    %v91 = vpack.c.b16 %v80, %v79
    %v92 = vpack.c.b16 %v82, %v81
    %v93 = vpack.c.b16 %v84, %v83
    %v94 = vpack.c.b16 %v86, %v85
    %103 = vmatprep.subr.bf16.mxu0 0
    %104 = vmatpush1.bf16.msra.mxu0 %v87
    %105 = vmatprep.subr.bf16.mxu0 0
    %106 = vmatpush1.bf16.msra.mxu0 %v88
    %107 = vmatprep.subr.bf16.mxu0 0
    %108 = vmatpush1.bf16.msra.mxu0 %v89
    %109 = vmatprep.subr.bf16.mxu0 0
    %110 = vmatpush1.bf16.msra.mxu0 %v90
    %111 = vmatprep.subr.bf16.mxu0 0
    %112 = vmatpush1.bf16.msra.mxu0 %v91
    %113 = vmatprep.subr.bf16.mxu0 0
    %114 = vmatpush1.bf16.msra.mxu0 %v92
    %115 = vmatprep.subr.bf16.mxu0 0
    %116 = vmatpush1.bf16.msra.mxu0 %v93
    %117 = vmatprep.subr.bf16.mxu0 0
    %118 = vmatpush1.bf16.msra.mxu0 %v94
    %119 = vmatprep.subr.bf16.mxu0 0
    %120 = vmatpush1.bf16.msra.mxu0 0
    %121 = vmatprep.subr.bf16.mxu0 0
    %122 = vmatpush1.bf16.msra.mxu0 0
    %123 = vmatprep.subr.bf16.mxu0 0
    %124 = vmatpush1.bf16.msra.mxu0 0
    %125 = vmatprep.subr.bf16.mxu0 0
    %126 = vmatpush1.bf16.msra.mxu0 0
    %127 = vmatprep.subr.bf16.mxu0 0
    %128 = vmatpush1.bf16.msra.mxu0 0
    %129 = vmatprep.subr.bf16.mxu0 0
    %130 = vmatpush1.bf16.msra.mxu0 0
    %131 = vmatprep.subr.bf16.mxu0 0
    %132 = vmatpush1.bf16.msra.mxu0 0
    %133 = vmatprep.subr.bf16.mxu0 0
    %134 = vmatpush1.bf16.msra.mxu0 0
    %135 = vmatprep.mubr.bf16.mxu0 0
    %136 = vmatmul.mubr.bf16.gmra.mrb[0].mxu0 %v31
    %v137 = vpop.f32.mrb[0].mxu0
    %v138 = vadd.f32 %v53, %v137
    %v139 = vpop.f32.mrb[0].mxu0
    %v140 = vpop.f32.mrb[0].mxu0
    %v141 = vpop.f32.mrb[0].mxu0
    %142 = vdwg.mxu0
    %v143 = vtanh.pop %v138
    %v144 = vpack.c.bf16 %v143, %v143
    %s145 = scalar_lea.vmem [#allocation2], 64
    %v146 = vld [vmem:[%s145] sm:$0xf]
    %v147 = vld [vmem:[%s145 + $0x4] sm:$0xf]
    %v148 = vld [vmem:[%s145 + $0x8] sm:$0xf]
    %v149 = vld [vmem:[%s145 + $0xc] sm:$0xf]
    %v150 = vld [vmem:[%s145 + $0x10] sm:$0xf]
    %v151 = vld [vmem:[%s145 + $0x14] sm:$0xf]
    %v152 = vld [vmem:[%s145 + $0x18] sm:$0xf]
    %v153 = vld [vmem:[%s145 + $0x1c] sm:$0xf]
    %v154 = vld [vmem:[%s145 + $0x20] sm:$0xf]
    %v155 = vld [vmem:[%s145 + $0x24] sm:$0xf]
    %v156 = vld [vmem:[%s145 + $0x28] sm:$0xf]
    %v157 = vld [vmem:[%s145 + $0x2c] sm:$0xf]
    %v158 = vld [vmem:[%s145 + $0x30] sm:$0xf]
    %v159 = vld [vmem:[%s145 + $0x34] sm:$0xf]
    %v160 = vld [vmem:[%s145 + $0x38] sm:$0xf]
    %v161 = vld [vmem:[%s145 + $0x3c] sm:$0xf]
    %s162 = scalar_lea.vmem %s2, 1
    %v163 = vld [vmem:[%s162] sm:$0x1]
    %v165 = vlaneseq
    %v166 = vshrl.u32 %v165, 7
    %v167 = vsub.s32 0, %v166
    %v168 = vrot.slane %v163, %v167
    %v186 = vunpack.c.l.b16 %v146
    %v187 = vunpack.c.l.b16 %v147
    %v188 = vunpack.c.l.b16 %v148
    %v189 = vunpack.c.l.b16 %v149
    %v190 = vunpack.c.l.b16 %v150
    %v191 = vunpack.c.l.b16 %v151
    %v192 = vunpack.c.l.b16 %v152
    %v193 = vunpack.c.l.b16 %v153
    %v194 = vunpack.c.l.b16 %v154
    %v195 = vunpack.c.l.b16 %v155
    %v196 = vunpack.c.l.b16 %v156
    %v197 = vunpack.c.l.b16 %v157
    %v198 = vunpack.c.l.b16 %v158
    %v199 = vunpack.c.l.b16 %v159
    %v200 = vunpack.c.l.b16 %v160
    %v201 = vunpack.c.l.b16 %v161
    %v202 = vpack.c.b16 %v187, %v186
    %v203 = vpack.c.b16 %v189, %v188
    %v204 = vpack.c.b16 %v191, %v190
    %v205 = vpack.c.b16 %v193, %v192
    %v206 = vpack.c.b16 %v195, %v194
    %v207 = vpack.c.b16 %v197, %v196
    %v208 = vpack.c.b16 %v199, %v198
    %v209 = vpack.c.b16 %v201, %v200
    %218 = vmatprep.subr.bf16.mxu0 0
    %219 = vmatpush1.bf16.msra.mxu0 %v202
    %220 = vmatprep.subr.bf16.mxu0 0
    %221 = vmatpush1.bf16.msra.mxu0 %v203
    %222 = vmatprep.subr.bf16.mxu0 0
    %223 = vmatpush1.bf16.msra.mxu0 %v204
    %224 = vmatprep.subr.bf16.mxu0 0
    %225 = vmatpush1.bf16.msra.mxu0 %v205
    %226 = vmatprep.subr.bf16.mxu0 0
    %227 = vmatpush1.bf16.msra.mxu0 %v206
    %228 = vmatprep.subr.bf16.mxu0 0
    %229 = vmatpush1.bf16.msra.mxu0 %v207
    %230 = vmatprep.subr.bf16.mxu0 0
    %231 = vmatpush1.bf16.msra.mxu0 %v208
    %232 = vmatprep.subr.bf16.mxu0 0
    %233 = vmatpush1.bf16.msra.mxu0 %v209
    %234 = vmatprep.subr.bf16.mxu0 0
    %235 = vmatpush1.bf16.msra.mxu0 0
    %236 = vmatprep.subr.bf16.mxu0 0
    %237 = vmatpush1.bf16.msra.mxu0 0
    %238 = vmatprep.subr.bf16.mxu0 0
    %239 = vmatpush1.bf16.msra.mxu0 0
    %240 = vmatprep.subr.bf16.mxu0 0
    %241 = vmatpush1.bf16.msra.mxu0 0
    %242 = vmatprep.subr.bf16.mxu0 0
    %243 = vmatpush1.bf16.msra.mxu0 0
    %244 = vmatprep.subr.bf16.mxu0 0
    %245 = vmatpush1.bf16.msra.mxu0 0
    %246 = vmatprep.subr.bf16.mxu0 0
    %247 = vmatpush1.bf16.msra.mxu0 0
    %248 = vmatprep.subr.bf16.mxu0 0
    %249 = vmatpush1.bf16.msra.mxu0 0
    %250 = vmatprep.mubr.bf16.mxu0 0
    %251 = vmatmul.mubr.bf16.gmra.mrb[0].mxu0 %v144
    %v252 = vpop.f32.mrb[0].mxu0
    %v253 = vadd.f32 %v168, %v252
    %v254 = vpop.f32.mrb[0].mxu0
    %v255 = vpop.f32.mrb[0].mxu0
    %v256 = vpop.f32.mrb[0].mxu0
    %257 = vdwg.mxu0
    %v258 = vtanh.pop %v253
    %v259 = vadd.f32 %v143, %v258
    %v260 = vpack.c.bf16 %v258, %v258
    %s261 = scalar_lea.vmem [#allocation2], 128
    %v262 = vld [vmem:[%s261] sm:$0xf]
    %v263 = vld [vmem:[%s261 + $0x4] sm:$0xf]
    %v264 = vld [vmem:[%s261 + $0x8] sm:$0xf]
    %v265 = vld [vmem:[%s261 + $0xc] sm:$0xf]
    %v266 = vld [vmem:[%s261 + $0x10] sm:$0xf]
    %v267 = vld [vmem:[%s261 + $0x14] sm:$0xf]
    %v268 = vld [vmem:[%s261 + $0x18] sm:$0xf]
    %v269 = vld [vmem:[%s261 + $0x1c] sm:$0xf]
    %v270 = vld [vmem:[%s261 + $0x20] sm:$0xf]
    %v271 = vld [vmem:[%s261 + $0x24] sm:$0xf]
    %v272 = vld [vmem:[%s261 + $0x28] sm:$0xf]
    %v273 = vld [vmem:[%s261 + $0x2c] sm:$0xf]
    %v274 = vld [vmem:[%s261 + $0x30] sm:$0xf]
    %v275 = vld [vmem:[%s261 + $0x34] sm:$0xf]
    %v276 = vld [vmem:[%s261 + $0x38] sm:$0xf]
    %v277 = vld [vmem:[%s261 + $0x3c] sm:$0xf]
    %s278 = scalar_lea.vmem %s2, 2
    %v279 = vld [vmem:[%s278] sm:$0x1]
    %v281 = vlaneseq
    %v282 = vshrl.u32 %v281, 7
    %v283 = vsub.s32 0, %v282
    %v284 = vrot.slane %v279, %v283
    %v302 = vunpack.c.l.b16 %v262
    %v303 = vunpack.c.l.b16 %v263
    %v304 = vunpack.c.l.b16 %v264
    %v305 = vunpack.c.l.b16 %v265
    %v306 = vunpack.c.l.b16 %v266
    %v307 = vunpack.c.l.b16 %v267
    %v308 = vunpack.c.l.b16 %v268
    %v309 = vunpack.c.l.b16 %v269
    %v310 = vunpack.c.l.b16 %v270
    %v311 = vunpack.c.l.b16 %v271
    %v312 = vunpack.c.l.b16 %v272
    %v313 = vunpack.c.l.b16 %v273
    %v314 = vunpack.c.l.b16 %v274
    %v315 = vunpack.c.l.b16 %v275
    %v316 = vunpack.c.l.b16 %v276
    %v317 = vunpack.c.l.b16 %v277
    %v318 = vpack.c.b16 %v303, %v302
    %v319 = vpack.c.b16 %v305, %v304
    %v320 = vpack.c.b16 %v307, %v306
    %v321 = vpack.c.b16 %v309, %v308
    %v322 = vpack.c.b16 %v311, %v310
    %v323 = vpack.c.b16 %v313, %v312
    %v324 = vpack.c.b16 %v315, %v314
    %v325 = vpack.c.b16 %v317, %v316
    %334 = vmatprep.subr.bf16.mxu0 0
    %335 = vmatpush1.bf16.msra.mxu0 %v318
    %336 = vmatprep.subr.bf16.mxu0 0
    %337 = vmatpush1.bf16.msra.mxu0 %v319
    %338 = vmatprep.subr.bf16.mxu0 0
    %339 = vmatpush1.bf16.msra.mxu0 %v320
    %340 = vmatprep.subr.bf16.mxu0 0
    %341 = vmatpush1.bf16.msra.mxu0 %v321
    %342 = vmatprep.subr.bf16.mxu0 0
    %343 = vmatpush1.bf16.msra.mxu0 %v322
    %344 = vmatprep.subr.bf16.mxu0 0
    %345 = vmatpush1.bf16.msra.mxu0 %v323
    %346 = vmatprep.subr.bf16.mxu0 0
    %347 = vmatpush1.bf16.msra.mxu0 %v324
    %348 = vmatprep.subr.bf16.mxu0 0
    %349 = vmatpush1.bf16.msra.mxu0 %v325
    %350 = vmatprep.subr.bf16.mxu0 0
    %351 = vmatpush1.bf16.msra.mxu0 0
    %352 = vmatprep.subr.bf16.mxu0 0
    %353 = vmatpush1.bf16.msra.mxu0 0
    %354 = vmatprep.subr.bf16.mxu0 0
    %355 = vmatpush1.bf16.msra.mxu0 0
    %356 = vmatprep.subr.bf16.mxu0 0
    %357 = vmatpush1.bf16.msra.mxu0 0
    %358 = vmatprep.subr.bf16.mxu0 0
    %359 = vmatpush1.bf16.msra.mxu0 0
    %360 = vmatprep.subr.bf16.mxu0 0
    %361 = vmatpush1.bf16.msra.mxu0 0
    %362 = vmatprep.subr.bf16.mxu0 0
    %363 = vmatpush1.bf16.msra.mxu0 0
    %364 = vmatprep.subr.bf16.mxu0 0
    %365 = vmatpush1.bf16.msra.mxu0 0
    %366 = vmatprep.mubr.bf16.mxu0 0
    %367 = vmatmul.mubr.bf16.gmra.mrb[0].mxu0 %v260
    %v368 = vpop.f32.mrb[0].mxu0
    %v369 = vadd.f32 %v284, %v368
    %v370 = vpop.f32.mrb[0].mxu0
    %v371 = vpop.f32.mrb[0].mxu0
    %v372 = vpop.f32.mrb[0].mxu0
    %373 = vdwg.mxu0
    %v374 = vtanh.pop %v369
    %v375 = vadd.f32 %v259, %v374
    %v376 = vpack.c.bf16 %v375, %v375
    %s377 = scalar_lea.vmem [#allocation2], 192
    %v378 = vld [vmem:[%s377] sm:$0xf]
    %v379 = vld [vmem:[%s377 + $0x4] sm:$0xf]
    %v380 = vld [vmem:[%s377 + $0x8] sm:$0xf]
    %v381 = vld [vmem:[%s377 + $0xc] sm:$0xf]
    %v382 = vld [vmem:[%s377 + $0x10] sm:$0xf]
    %v383 = vld [vmem:[%s377 + $0x14] sm:$0xf]
    %v384 = vld [vmem:[%s377 + $0x18] sm:$0xf]
    %v385 = vld [vmem:[%s377 + $0x1c] sm:$0xf]
    %v386 = vld [vmem:[%s377 + $0x20] sm:$0xf]
    %v387 = vld [vmem:[%s377 + $0x24] sm:$0xf]
    %v388 = vld [vmem:[%s377 + $0x28] sm:$0xf]
    %v389 = vld [vmem:[%s377 + $0x2c] sm:$0xf]
    %v390 = vld [vmem:[%s377 + $0x30] sm:$0xf]
    %v391 = vld [vmem:[%s377 + $0x34] sm:$0xf]
    %v392 = vld [vmem:[%s377 + $0x38] sm:$0xf]
    %v393 = vld [vmem:[%s377 + $0x3c] sm:$0xf]
    %s394 = scalar_lea.vmem %s2, 3
    %v395 = vld [vmem:[%s394] sm:$0x1]
    %v397 = vlaneseq
    %v398 = vshrl.u32 %v397, 7
    %v399 = vsub.s32 0, %v398
    %v400 = vrot.slane %v395, %v399
    %v418 = vunpack.c.l.b16 %v378
    %v419 = vunpack.c.l.b16 %v379
    %v420 = vunpack.c.l.b16 %v380
    %v421 = vunpack.c.l.b16 %v381
    %v422 = vunpack.c.l.b16 %v382
    %v423 = vunpack.c.l.b16 %v383
    %v424 = vunpack.c.l.b16 %v384
    %v425 = vunpack.c.l.b16 %v385
    %v426 = vunpack.c.l.b16 %v386
    %v427 = vunpack.c.l.b16 %v387
    %v428 = vunpack.c.l.b16 %v388
    %v429 = vunpack.c.l.b16 %v389
    %v430 = vunpack.c.l.b16 %v390
    %v431 = vunpack.c.l.b16 %v391
    %v432 = vunpack.c.l.b16 %v392
    %v433 = vunpack.c.l.b16 %v393
    %v434 = vpack.c.b16 %v419, %v418
    %v435 = vpack.c.b16 %v421, %v420
    %v436 = vpack.c.b16 %v423, %v422
    %v437 = vpack.c.b16 %v425, %v424
    %v438 = vpack.c.b16 %v427, %v426
    %v439 = vpack.c.b16 %v429, %v428
    %v440 = vpack.c.b16 %v431, %v430
    %v441 = vpack.c.b16 %v433, %v432
    %450 = vmatprep.subr.bf16.mxu0 0
    %451 = vmatpush1.bf16.msra.mxu0 %v434
    %452 = vmatprep.subr.bf16.mxu0 0
    %453 = vmatpush1.bf16.msra.mxu0 %v435
    %454 = vmatprep.subr.bf16.mxu0 0
    %455 = vmatpush1.bf16.msra.mxu0 %v436
    %456 = vmatprep.subr.bf16.mxu0 0
    %457 = vmatpush1.bf16.msra.mxu0 %v437
    %458 = vmatprep.subr.bf16.mxu0 0
    %459 = vmatpush1.bf16.msra.mxu0 %v438
    %460 = vmatprep.subr.bf16.mxu0 0
    %461 = vmatpush1.bf16.msra.mxu0 %v439
    %462 = vmatprep.subr.bf16.mxu0 0
    %463 = vmatpush1.bf16.msra.mxu0 %v440
    %464 = vmatprep.subr.bf16.mxu0 0
    %465 = vmatpush1.bf16.msra.mxu0 %v441
    %466 = vmatprep.subr.bf16.mxu0 0
    %467 = vmatpush1.bf16.msra.mxu0 0
    %468 = vmatprep.subr.bf16.mxu0 0
    %469 = vmatpush1.bf16.msra.mxu0 0
    %470 = vmatprep.subr.bf16.mxu0 0
    %471 = vmatpush1.bf16.msra.mxu0 0
    %472 = vmatprep.subr.bf16.mxu0 0
    %473 = vmatpush1.bf16.msra.mxu0 0
    %474 = vmatprep.subr.bf16.mxu0 0
    %475 = vmatpush1.bf16.msra.mxu0 0
    %476 = vmatprep.subr.bf16.mxu0 0
    %477 = vmatpush1.bf16.msra.mxu0 0
    %478 = vmatprep.subr.bf16.mxu0 0
    %479 = vmatpush1.bf16.msra.mxu0 0
    %480 = vmatprep.subr.bf16.mxu0 0
    %481 = vmatpush1.bf16.msra.mxu0 0
    %482 = vmatprep.mubr.bf16.mxu0 0
    %483 = vmatmul.mubr.bf16.gmra.mrb[0].mxu0 %v376
    %v484 = vpop.f32.mrb[0].mxu0
    %v485 = vadd.f32 %v400, %v484
    %v486 = vpop.f32.mrb[0].mxu0
    %v487 = vpop.f32.mrb[0].mxu0
    %v488 = vpop.f32.mrb[0].mxu0
    %489 = vdwg.mxu0
    %490 = vst [vmem:[#allocation5] sm:$0xff] %v485
    // Predicated region
    $region18: #{json2pheno_forward.1} parent=1 // pred_check
      _
    $region19: #{json2pheno_forward.1} parent=1 // pred_check_branch
      %492 = sbr.rel (0) target = $region21
    $region20: #{json2pheno_forward.1} parent=1 // pred_region
      %s494 = ssub.s32 128, 128
      %495 = vsyncadd [#allocation4], %s494
      %s497 = sshll.u32 [#allocation5], 4
      %s498 = int_to_ptr.vmem [resolvable:$true] %s497
      %500 = dma.vmem_to_hbm [thread:$0]  %s498, 128, %s3, [#allocation4]
    $region21: #{json2pheno_forward.1} parent=1 // pred_fallthru
      _
    // Predicated region
    $region22: #{json2pheno_forward.1} parent=1 // pred_check
      _
    $region23: #{json2pheno_forward.1} parent=1 // pred_check_branch
      %502 = sbr.rel (0) target = $region25
    $region24: #{json2pheno_forward.1} parent=1 // pred_region
      %503 = dma.done [#allocation4], 128
    $region25: #{json2pheno_forward.1} parent=1 // pred_fallthru
      _
    %504 = vsyncpa [#allocation3], 1
    %505 = vsyncpa [#allocation4], 1

</llo_original>
